<compile_context>
chip_gen: v7x
topology: tpu7x:2x2x1
jax: 0.10.0
libtpu: 0.0.40
codegen_flags: <defaults>
</compile_context>

<pallas_src>
import functools

import numpy as np

import jax
import jax.numpy as jnp
from jax.experimental import pallas as pl
from jax.experimental.pallas import tpu as pltpu


def _avg_pool_shortcut_kernel(x_ref, p_ref, o_ref, *, in_c, out_c, inv, precision):
    """x_ref: (nb, in_c, Lin); p_ref: (Lin, Lout); o_ref: (nb, out_c, Lout)."""
    nb = x_ref.shape[0]
    l_out = o_ref.shape[2]
    p = p_ref[...]
    if out_c > in_c:
        zero_pad = jnp.zeros((out_c - in_c, l_out), o_ref.dtype)
    for b in range(nb):  # nb is a small static int
        pooled = jnp.dot(x_ref[b], p,
                         preferred_element_type=jnp.float32,
                         precision=precision) * inv
        o_ref[b, :in_c, :] = pooled.astype(o_ref.dtype)
        if out_c > in_c:
            o_ref[b, in_c:, :] = zero_pad


def _selection_matrix(h_blk, W, th, Wo, k, stride, dtype):
    """(h_blk*W, th*Wo) 0/1 matrix selecting each (k x k) pooling window."""
    p = np.zeros((h_blk * W, th * Wo), np.float32)
    for ho in range(th):
        for dh in range(k):
            hi = ho * stride + dh
            if hi >= h_blk:
                continue
            for wo in range(Wo):
                for dw in range(k):
                    wi = wo * stride + dw
                    if wi >= W:
                        continue
                    p[hi * W + wi, ho * Wo + wo] = 1.0
    return jnp.asarray(p, dtype=dtype)   # 0/1 are exact in every dtype


def _pick_tiles(N, in_c, out_c, H, W, Ho, Wo, k, stride, itemsize,
                budget=16 * 1024 * 1024):
    """Pick (batch block nb, output-row tile th) and the resulting VMEM need."""
    def block_bytes(nb, th):
        h_blk = H if th == Ho else th * stride
        x_b = nb * in_c * h_blk * W
        o_b = nb * out_c * th * Wo
        p_b = h_blk * W * th * Wo
        return 2 * (x_b + o_b + p_b) * itemsize       # 2x: double buffering

    # Row tile: prefer the whole image; shrink only if it does not fit.  Only
    # legal when k == stride (even H) so every tile's input window is exactly
    # th*stride rows and one shared selection matrix serves all tiles.
    th = Ho
    if block_bytes(1, Ho) > budget and k == stride:
        cands = [t for t in range(1, Ho) if Ho % t == 0
                 and (t * stride * W) % 128 == 0        # x block lane width
                 and (t * Wo) % 128 == 0                # out block lane width
                 and block_bytes(1, t) <= budget]
        if cands:
            th = max(cands)

    # Batch block: largest divisor of N whose blocks fit, but keep >= 2 grid
    # steps whenever possible (two TensorCores on v7x).
    row_steps = Ho // th
    nb = 1
    for cand in range(2, N + 1):
        if N % cand:
            continue
        if block_bytes(cand, th) > budget:
            break
        if (N // cand) * row_steps < min(2, N * row_steps):
            break
        nb = cand
    return nb, th, block_bytes(nb, th)


def avg_pool_shortcut(x, *, stride, out_c):
    """AvgPoolShortCut.forward for NCHW `x` (matches the PyTorch module)."""
    N, in_c, H, W = x.shape
    assert out_c >= in_c, "out_c must be >= in_c (module pads channels with zeros)"

    k = 1 if (H % 2 != 0) else stride              # F.avg_pool2d kernel size
    Ho = (H - k) // stride + 1
    Wo = (W - k) // stride + 1

    itemsize = jnp.dtype(x.dtype).itemsize
    nb, th, needed = _pick_tiles(N, in_c, out_c, H, W, Ho, Wo, k, stride, itemsize)
    h_blk = H if th == Ho else th * stride

    p = _selection_matrix(h_blk, W, th, Wo, k, stride, x.dtype)
    inv = 1.0 / float(k * k)
    precision = (jax.lax.Precision.HIGHEST
                 if jnp.dtype(x.dtype) == jnp.float32 else None)

    x_flat = x.reshape(N, in_c, H * W)             # free contiguous reshape
    grid = (N // nb, Ho // th)

    kernel = functools.partial(_avg_pool_shortcut_kernel,
                               in_c=in_c, out_c=out_c, inv=inv,
                               precision=precision)
    vmem_limit = int(min(max(32 * 1024 * 1024, needed + 4 * 1024 * 1024),
                         100 * 1024 * 1024))

    out_flat = pl.pallas_call(
        kernel,
        out_shape=jax.ShapeDtypeStruct((N, out_c, Ho * Wo), x.dtype),
        grid=grid,
        in_specs=[
            pl.BlockSpec((nb, in_c, h_blk * W), lambda n, r: (n, 0, r)),
            pl.BlockSpec((h_blk * W, th * Wo), lambda n, r: (0, 0)),
        ],
        out_specs=pl.BlockSpec((nb, out_c, th * Wo), lambda n, r: (n, 0, r)),
        compiler_params=pltpu.CompilerParams(
            dimension_semantics=("parallel", "parallel"),
            vmem_limit_bytes=vmem_limit),
    )(x_flat, p)
    return out_flat.reshape(N, out_c, Ho, Wo)      # free contiguous reshape


def _reference(x, stride, out_c):
    """Pure-JAX reference matching the PyTorch forward (for self-check)."""
    N, in_c, H, W = x.shape
    k = 1 if (H % 2 != 0) else stride
    Ho = (H - k) // stride + 1
    Wo = (W - k) // stride + 1
    acc = jnp.zeros((N, in_c, Ho, Wo), x.dtype)
    for i in range(k):
        for j in range(k):
            acc = acc + x[:, :, i:i + stride * (Ho - 1) + 1:stride,
                          j:j + stride * (Wo - 1) + 1:stride]
    y = acc / float(k * k)
    pad = jnp.zeros((N, out_c - in_c, Ho, Wo), x.dtype)
    return jnp.concatenate([y, pad], axis=1)


if __name__ == "__main__":
    key = jax.random.PRNGKey(0)
    k1, k2 = jax.random.split(key)

    # Case 1: even spatial dim -> avg_pool2d(stride, stride), channels 4 -> 8.
    stride, in_c, out_c = 2, 4, 8
    x = jax.random.normal(k1, (2, in_c, 16, 16), jnp.float32)
    y = avg_pool_shortcut(x, stride=stride, out_c=out_c)
    jax.block_until_ready(y)
    assert y.shape == (2, out_c, 8, 8) and y.dtype == jnp.float32
    assert jnp.allclose(y, _reference(x, stride, out_c), atol=1e-5, rtol=1e-5)

    # Case 2: odd spatial dim -> avg_pool2d(1, stride) (pure strided subsampling).
    x_odd = jax.random.normal(k2, (2, in_c, 15, 15), jnp.float32)
    y_odd = avg_pool_shortcut(x_odd, stride=stride, out_c=out_c)
    jax.block_until_ready(y_odd)
    assert y_odd.shape == (2, out_c, 8, 8)
    assert jnp.allclose(y_odd, _reference(x_odd, stride, out_c), atol=1e-5, rtol=1e-5)

    print("KERNEL_OK")
</pallas_src>

<mosaic_0001>
module attributes {stable_mosaic.version = 11 : i64} {
  func.func @_avg_pool_shortcut_kernel(%arg0: i32, %arg1: i32, %arg2: memref<1x4x256xf32, #tpu.memory_space<vmem>>, %arg3: memref<256x64xf32, #tpu.memory_space<vmem>>, %arg4: memref<1x8x64xf32, #tpu.memory_space<vmem>>) attributes {dimension_semantics = [#tpu.dimension_semantics<parallel>, #tpu.dimension_semantics<parallel>], iteration_bounds = array<i64: 2, 1>, scalar_prefetch = 0 : i64, scratch_operands = 0 : i64, tpu.core_type = #tpu.core_type<tc>, window_params = [{transform_indices = @transform_0, window_bounds = array<i64: 1, 4, 256>}, {pipeline_mode = #tpu.pipeline_mode<synchronous>, transform_indices = @transform_1, window_bounds = array<i64: 256, 64>}, {transform_indices = @transform_2, window_bounds = array<i64: 1, 8, 64>}]} {
    %c0 = arith.constant 0 : index
    %c0_0 = arith.constant 0 : index
    %0 = vector.load %arg3[%c0, %c0_0] : memref<256x64xf32, #tpu.memory_space<vmem>>, vector<256x64xf32>
    %cst = arith.constant 0.000000e+00 : f32
    %1 = vector.broadcast %cst : f32 to vector<4x64xf32>
    %c0_1 = arith.constant 0 : index
    %c0_2 = arith.constant 0 : index
    %c0_3 = arith.constant 0 : index
    %2 = vector.load %arg2[%c0_1, %c0_2, %c0_3] : memref<1x4x256xf32, #tpu.memory_space<vmem>>, vector<1x4x256xf32>
    %3 = vector.shape_cast %2 : vector<1x4x256xf32> to vector<4x256xf32>
    %cst_4 = arith.constant dense<0.000000e+00> : vector<4x64xf32>
    %4 = tpu.matmul %3, %0, %cst_4 {dimension_numbers = #tpu.dot_dimension_numbers<[1], [0], [0], [1], [0, 0, 1, 1], [], []>, precision = #tpu.contract_precision<fp32>} : vector<4x256xf32>, vector<256x64xf32>, vector<4x64xf32> -> vector<4x64xf32>
    %cst_5 = arith.constant 2.500000e-01 : f32
    %5 = vector.broadcast %cst_5 : f32 to vector<4x64xf32>
    %6 = arith.mulf %4, %5 : vector<4x64xf32>
    %c0_6 = arith.constant 0 : index
    %c0_7 = arith.constant 0 : index
    %c0_8 = arith.constant 0 : index
    %7 = vector.load %arg4[%c0_6, %c0_7, %c0_8] : memref<1x8x64xf32, #tpu.memory_space<vmem>>, vector<1x4x64xf32>
    %8 = vector.shape_cast %7 : vector<1x4x64xf32> to vector<4x64xf32>
    %9 = vector.shape_cast %6 : vector<4x64xf32> to vector<1x4x64xf32>
    tpu.vector_store %arg4[%c0_6, %c0_7, %c0_8], %9 {strides = array<i32>} : memref<1x8x64xf32, #tpu.memory_space<vmem>>, vector<1x4x64xf32>,
    %c0_9 = arith.constant 0 : index
    %c4 = arith.constant 4 : index
    %c0_10 = arith.constant 0 : index
    %10 = vector.load %arg4[%c0_9, %c4, %c0_10] : memref<1x8x64xf32, #tpu.memory_space<vmem>>, vector<1x4x64xf32>
    %11 = vector.shape_cast %10 : vector<1x4x64xf32> to vector<4x64xf32>
    %12 = vector.shape_cast %1 : vector<4x64xf32> to vector<1x4x64xf32>
    tpu.vector_store %arg4[%c0_9, %c4, %c0_10], %12 {strides = array<i32>} : memref<1x8x64xf32, #tpu.memory_space<vmem>>, vector<1x4x64xf32>,
    return
  }
  func.func @transform_0(%arg0: i32, %arg1: i32) -> (i32, i32, i32) {
    %c0_i32 = arith.constant 0 : i32
    %c0_i32_0 = arith.constant 0 : i32
    return %arg0, %c0_i32, %arg1 : i32, i32, i32
  }
  func.func @transform_1(%arg0: i32, %arg1: i32) -> (i32, i32) {
    %c0_i32 = arith.constant 0 : i32
    %c0_i32_0 = arith.constant 0 : i32
    %c0_i32_1 = arith.constant 0 : i32
    return %c0_i32, %c0_i32_0 : i32, i32
  }
  func.func @transform_2(%arg0: i32, %arg1: i32) -> (i32, i32, i32) {
    %c0_i32 = arith.constant 0 : i32
    %c0_i32_0 = arith.constant 0 : i32
    return %arg0, %c0_i32, %arg1 : i32, i32, i32
  }
}

</mosaic_0001>

<llo_original>
// kernel: tpu_custom_call.1
$region0: #{tpu_custom_call.1}
  #allocation0 [shape = 'u32[]', space=smem, size = 0x4, offset = 0x4, fixed_abs, tag = 'smem constant byte address 0x4 - core index']
  #allocation1 [shape = 'u32[144,128]{1,0:T(1,128)}', space=vmem, size = 0x12000, scoped, tag = 'internal scratch']
  %s0 = inlined_call_operand.vmem [shape: f32[2,4,256], index: 0, kind: input, shape index: {}]
  %s1 = inlined_call_operand.vmem [shape: f32[256,64], index: 1, kind: input, shape index: {}]
  %s2 = inlined_call_operand.hbm [shape: f32[2,8,64], index: 2, kind: output, shape index: {}]
  %s3 = sld [smem:[#allocation0]]
  $region41: #{tpu_custom_call.1} parent=0
    _
  %s5 = ssub.s32 1, %s3
  %s6 = scalar_select 0, %s5, %s3
  $region1: #{tpu_custom_call.1} parent=0
    #allocation2 [shape = 'u8[8192]{0}', space=vmem, size = 0x2000, scoped, tag = 'output window, operand 0']
    #allocation3 [shape = 's32[2]{0}', space=sflag, size = 0x8, scoped, tag = 'scoped memory for tpu_custom_call.1']
    %7 = vsyncpa [#allocation3], 0
    %s8 = scalar_lea.sflag [#allocation3], 1
    %9 = vsyncpa %s8, 0
    loop: start=0, step=1, limit=4
    $region2: #{tpu_custom_call.1} parent=1 // loop_pre_header
      _
    $region3: #{tpu_custom_call.1} parent=1 // loop_header
      %s11 = sphi 0, %s15
      %p12 = scmp.ge.s32.totalorder %s11, 4
      %s18 = sphi 0, %s30
      %s19 = sphi 0, %s26
      %s20 = sphi 0, %s18
      %s21 = sphi 0, %s19
      %s22 = sphi 0, %s20
      %s23 = sphi 0, %s21
      %s35 = sphi 0, %s37
      %s38 = sphi 0, %s35
      %s39 = sphi 0, %s38
      %s55 = sphi 0, %s39
      %s59 = sphi 0, %s59
      %s61 = sphi 0, %s59
      %s62 = sphi 0, %s61
      %s76 = sphi 0, %s62
      %s84 = sphi 0, %s86
      %s87 = sphi 0, %s84
      %s88 = sphi 0, %s87
      %s104 = sphi 0, %s88
    $region4: #{tpu_custom_call.1} parent=1 // loop_header_branch
      %14 = sbr.rel (%p12) target = $region8
    $region5: #{tpu_custom_call.1} parent=1 // loop_body
      %s16 = ssub.s32 %s11, 1
      %s17 = ssub.s32 %s11, 2
      %s24 = sadd.s32 1, %s19
      %p25 = scmp.ge.s32.totalorder %s24, 1
      %s26 = scalar_select %p25, 0, %s24
      %s27 = sadd.s32 1, %s18
      %s28 = scalar_select %p25, %s27, %s18
      %p29 = scmp.ge.s32.totalorder %s28, 2
      %s30 = scalar_select %p29, 0, %s28
      %s31 = ssub.s32 %s18, %s30
      %s32 = ssub.s32 %s19, %s26
      %s33 = sor.u32 %s31, %s32
      %p34 = scmp.eq.s32.totalorder %s33, 0
      %s36 = sadd.s32 %s35, 1
      %s37 = scalar_select %p34, %s35, %s36
      %p40 = pneg %p34
      %p41 = scmp.eq.s32.totalorder %s11, 1
      %p42 = por %p40, %p41
      %p43 = scmp.ne.s32.totalorder %s35, %s38
      %p44 = scmp.eq.s32.totalorder %s11, 0
      %p45 = por %p43, %p44
      %p46 = scmp.ne.s32.totalorder %s35, %s38
      %p47 = scmp.eq.s32.totalorder %s16, 1
      %p48 = por %p46, %p47
      %p49 = scmp.ne.s32.totalorder %s38, %s39
      %p50 = scmp.eq.s32.totalorder %s16, 0
      %p51 = por %p49, %p50
      %p52 = scmp.ne.s32.totalorder %s38, %s39
      %p53 = scmp.eq.s32.totalorder %s17, 1
      %p54 = por %p52, %p53
      %p56 = scmp.ne.s32.totalorder %s39, %s55
      %p57 = scmp.eq.s32.totalorder %s17, 0
      %p58 = por %p56, %p57
      %s60 = sadd.s32 %s59, 1
      %p63 = scmp.eq.s32.totalorder %s11, 1
      %p64 = scmp.ne.s32.totalorder %s59, %s61
      %p65 = scmp.eq.s32.totalorder %s11, 0
      %p66 = por %p64, %p65
      %p67 = scmp.ne.s32.totalorder %s59, %s61
      %p68 = scmp.eq.s32.totalorder %s16, 1
      %p69 = por %p67, %p68
      %p70 = scmp.ne.s32.totalorder %s61, %s62
      %p71 = scmp.eq.s32.totalorder %s16, 0
      %p72 = por %p70, %p71
      %p73 = scmp.ne.s32.totalorder %s61, %s62
      %p74 = scmp.eq.s32.totalorder %s17, 1
      %p75 = por %p73, %p74
      %p77 = scmp.ne.s32.totalorder %s62, %s76
      %p78 = scmp.eq.s32.totalorder %s17, 0
      %p79 = por %p77, %p78
      %s80 = ssub.s32 %s18, %s30
      %s81 = ssub.s32 %s19, %s26
      %s82 = sor.u32 %s80, %s81
      %p83 = scmp.eq.s32.totalorder %s82, 0
      %s85 = sadd.s32 %s84, 1
      %s86 = scalar_select %p83, %s84, %s85
      %p89 = pneg %p83
      %p90 = scmp.eq.s32.totalorder %s11, 1
      %p91 = por %p89, %p90
      %p92 = scmp.ne.s32.totalorder %s84, %s87
      %p93 = scmp.eq.s32.totalorder %s11, 0
      %p94 = por %p92, %p93
      %p95 = scmp.ne.s32.totalorder %s84, %s87
      %p96 = scmp.eq.s32.totalorder %s16, 1
      %p97 = por %p95, %p96
      %p98 = scmp.ne.s32.totalorder %s87, %s88
      %p99 = scmp.eq.s32.totalorder %s16, 0
      %p100 = por %p98, %p99
      %p101 = scmp.ne.s32.totalorder %s87, %s88
      %p102 = scmp.eq.s32.totalorder %s17, 1
      %p103 = por %p101, %p102
      %p105 = scmp.ne.s32.totalorder %s88, %s104
      %p106 = scmp.eq.s32.totalorder %s17, 0
      %p107 = por %p105, %p106
      %p108 = scmp.le.s32.totalorder 1, %s11
      %p109 = scmp.lt.s32.totalorder %s11, 3
      %p110 = pnand %p108, %p109
      %p111 = pneg %p110
      // Predicated region
      $region9: #{tpu_custom_call.1} parent=5 // pred_check
        _
      $region10: #{tpu_custom_call.1} parent=5 // pred_check_branch
        %113 = sbr.rel (%p110) target = $region12
      $region11: #{tpu_custom_call.1} parent=5 // pred_region
        %s114 = ssub.s32 %s11, 1
        // Predicated region
        $region13: #{tpu_custom_call.1} parent=11 // pred_check
          %p115 = pneg %p72
        $region14: #{tpu_custom_call.1} parent=11 // pred_check_branch
          %117 = sbr.rel (%p115) target = $region16
        $region15: #{tpu_custom_call.1} parent=11 // pred_region
          _
        $region16: #{tpu_custom_call.1} parent=11 // pred_fallthru
          _
      $region12: #{tpu_custom_call.1} parent=5 // pred_fallthru
        _
      %p118 = scmp.lt.s32.totalorder %s11, 2
      // Predicated region
      $region17: #{tpu_custom_call.1} parent=5 // pred_check
        %p119 = pneg %p118
      $region18: #{tpu_custom_call.1} parent=5 // pred_check_branch
        %121 = sbr.rel (%p119) target = $region20
      $region19: #{tpu_custom_call.1} parent=5 // pred_region
        // Predicated region
        $region21: #{tpu_custom_call.1} parent=19 // pred_check
          %p122 = pneg %p45
        $region22: #{tpu_custom_call.1} parent=19 // pred_check_branch
          %124 = sbr.rel (%p122) target = $region24
        $region23: #{tpu_custom_call.1} parent=19 // pred_region
          %s125 = smul.u32 2, %s19
          %p126 = scmp.lt.s32.totalorder %s18, 1
          %s127 = scalar_select %p126, %s18, 1
          %p128 = scmp.lt.s32.totalorder %s125, 1
          %s129 = scalar_select %p128, %s125, 1
          %s130 = smul.addr %s127, 2
          %s131 = sadd.s32 %s129, %s130
          %s132 = smul.addr %s131, 4
          %s133 = scalar_lea.vmem %s0, %s132
          %s134 = smul.u32 2, %s19
        $region24: #{tpu_custom_call.1} parent=19 // pred_fallthru
          _
      $region20: #{tpu_custom_call.1} parent=5 // pred_fallthru
        _
      %p135 = scmp.le.s32.totalorder 1, %s11
      %p136 = scmp.lt.s32.totalorder %s11, 3
      %p137 = pnand %p135, %p136
      %p138 = pneg %p137
      // Predicated region
      $region25: #{tpu_custom_call.1} parent=5 // pred_check
        _
      $region26: #{tpu_custom_call.1} parent=5 // pred_check_branch
        %140 = sbr.rel (%p137) target = $region28
      $region27: #{tpu_custom_call.1} parent=5 // pred_region
        %s141 = ssub.s32 %s11, 1
        %s142 = smul.u32 2, %s21
        %p143 = scmp.lt.s32.totalorder %s20, 1
        %s144 = scalar_select %p143, %s20, 1
        %p145 = scmp.lt.s32.totalorder %s142, 1
        %s146 = scalar_select %p145, %s142, 1
        %s147 = smul.addr %s144, 2
        %s148 = sadd.s32 %s146, %s147
        %s149 = smul.addr %s148, 4
        %s150 = scalar_lea.vmem %s0, %s149
        %p151 = pneg %p51
        %p152 = pneg %p48
        %p153 = pneg %p72
        %p154 = pneg %p69
        %p155 = pneg %p100
        %p156 = pneg %p97
        %s157 = sand.u32 %s87, 1
        %s158 = scalar_lea.sflag [#allocation3], %s157
        %s159 = sand.u32 %s87, 1
        %s160 = smul.addr %s159, 8
        %s161 = scalar_lea.vmem [#allocation2], %s160
        %s162 = smul.u32 2, %s21
        %p163 = scmp.lt.s32.totalorder %s20, 1
        %s164 = scalar_select %p163, %s20, 1
        %p165 = scmp.lt.s32.totalorder %s162, 1
        %s166 = scalar_select %p165, %s162, 1
        %s167 = smul.addr %s164, 2
        %s168 = sadd.s32 %s166, %s167
        %s169 = smul.addr %s168, 4
        %s170 = scalar_lea.vmem %s0, %s169
        %s171 = smul.u32 2, %s21
        %v172 = vld [vmem:[%s1] sm:$0xff]
        %v173 = vld [vmem:[%s1 + $0x8] sm:$0xff]
        %v174 = vld [vmem:[%s1 + $0x10] sm:$0xff]
        %v175 = vld [vmem:[%s1 + $0x18] sm:$0xff]
        %v176 = vld [vmem:[%s1 + $0x20] sm:$0xff]
        %v177 = vld [vmem:[%s1 + $0x28] sm:$0xff]
        %v178 = vld [vmem:[%s1 + $0x30] sm:$0xff]
        %v179 = vld [vmem:[%s1 + $0x38] sm:$0xff]
        %v180 = vld [vmem:[%s1 + $0x40] sm:$0xff]
        %v181 = vld [vmem:[%s1 + $0x48] sm:$0xff]
        %v182 = vld [vmem:[%s1 + $0x50] sm:$0xff]
        %v183 = vld [vmem:[%s1 + $0x58] sm:$0xff]
        %v184 = vld [vmem:[%s1 + $0x60] sm:$0xff]
        %v185 = vld [vmem:[%s1 + $0x68] sm:$0xff]
        %v186 = vld [vmem:[%s1 + $0x70] sm:$0xff]
        %v187 = vld [vmem:[%s1 + $0x78] sm:$0xff]
        %v188 = vld [vmem:[%s1 + $0x80] sm:$0xff]
        %v189 = vld [vmem:[%s1 + $0x88] sm:$0xff]
        %v190 = vld [vmem:[%s1 + $0x90] sm:$0xff]
        %v191 = vld [vmem:[%s1 + $0x98] sm:$0xff]
        %v192 = vld [vmem:[%s1 + $0xa0] sm:$0xff]
        %v193 = vld [vmem:[%s1 + $0xa8] sm:$0xff]
        %v194 = vld [vmem:[%s1 + $0xb0] sm:$0xff]
        %v195 = vld [vmem:[%s1 + $0xb8] sm:$0xff]
        %v196 = vld [vmem:[%s1 + $0xc0] sm:$0xff]
        %v197 = vld [vmem:[%s1 + $0xc8] sm:$0xff]
        %v198 = vld [vmem:[%s1 + $0xd0] sm:$0xff]
        %v199 = vld [vmem:[%s1 + $0xd8] sm:$0xff]
        %v200 = vld [vmem:[%s1 + $0xe0] sm:$0xff]
        %v201 = vld [vmem:[%s1 + $0xe8] sm:$0xff]
        %v202 = vld [vmem:[%s1 + $0xf0] sm:$0xff]
        %v203 = vld [vmem:[%s1 + $0xf8] sm:$0xff]
        %v204 = vld [vmem:[%s170] sm:$0xff]
        %v206 = vcombine.high %v204, %v204
        %208 = vmatprep.subr.mxu0 0.0
        %v209 = vand.u32 %v172, 4294901760
        %210 = vmatpush1.msra.mxu0 %v209
        %211 = vmatprep.subr.mxu0 0.0
        %v212 = vand.u32 %v173, 4294901760
        %213 = vmatpush1.msra.mxu0 %v212
        %214 = vmatprep.subr.mxu0 0.0
        %v215 = vand.u32 %v174, 4294901760
        %216 = vmatpush1.msra.mxu0 %v215
        %217 = vmatprep.subr.mxu0 0.0
        %v218 = vand.u32 %v175, 4294901760
        %219 = vmatpush1.msra.mxu0 %v218
        %220 = vmatprep.subr.mxu0 0.0
        %v221 = vand.u32 %v176, 4294901760
        %222 = vmatpush1.msra.mxu0 %v221
        %223 = vmatprep.subr.mxu0 0.0
        %v224 = vand.u32 %v177, 4294901760
        %225 = vmatpush1.msra.mxu0 %v224
        %226 = vmatprep.subr.mxu0 0.0
        %v227 = vand.u32 %v178, 4294901760
        %228 = vmatpush1.msra.mxu0 %v227
        %229 = vmatprep.subr.mxu0 0.0
        %v230 = vand.u32 %v179, 4294901760
        %231 = vmatpush1.msra.mxu0 %v230
        %232 = vmatprep.subr.mxu0 0.0
        %v233 = vand.u32 %v180, 4294901760
        %234 = vmatpush1.msra.mxu0 %v233
        %235 = vmatprep.subr.mxu0 0.0
        %v236 = vand.u32 %v181, 4294901760
        %237 = vmatpush1.msra.mxu0 %v236
        %238 = vmatprep.subr.mxu0 0.0
        %v239 = vand.u32 %v182, 4294901760
        %240 = vmatpush1.msra.mxu0 %v239
        %241 = vmatprep.subr.mxu0 0.0
        %v242 = vand.u32 %v183, 4294901760
        %243 = vmatpush1.msra.mxu0 %v242
        %244 = vmatprep.subr.mxu0 0.0
        %v245 = vand.u32 %v184, 4294901760
        %246 = vmatpush1.msra.mxu0 %v245
        %247 = vmatprep.subr.mxu0 0.0
        %v248 = vand.u32 %v185, 4294901760
        %249 = vmatpush1.msra.mxu0 %v248
        %250 = vmatprep.subr.mxu0 0.0
        %v251 = vand.u32 %v186, 4294901760
        %252 = vmatpush1.msra.mxu0 %v251
        %253 = vmatprep.subr.mxu0 0.0
        %v254 = vand.u32 %v187, 4294901760
        %255 = vmatpush1.msra.mxu0 %v254
        %256 = vmatprep.subr.mxu0 0.0
        %v257 = vand.u32 %v188, 4294901760
        %258 = vmatpush1.msra.mxu0 %v257
        %259 = vmatprep.subr.mxu0 0.0
        %v260 = vand.u32 %v189, 4294901760
        %261 = vmatpush1.msra.mxu0 %v260
        %262 = vmatprep.subr.mxu0 0.0
        %v263 = vand.u32 %v190, 4294901760
        %264 = vmatpush1.msra.mxu0 %v263
        %265 = vmatprep.subr.mxu0 0.0
        %v266 = vand.u32 %v191, 4294901760
        %267 = vmatpush1.msra.mxu0 %v266
        %268 = vmatprep.subr.mxu0 0.0
        %v269 = vand.u32 %v192, 4294901760
        %270 = vmatpush1.msra.mxu0 %v269
        %271 = vmatprep.subr.mxu0 0.0
        %v272 = vand.u32 %v193, 4294901760
        %273 = vmatpush1.msra.mxu0 %v272
        %274 = vmatprep.subr.mxu0 0.0
        %v275 = vand.u32 %v194, 4294901760
        %276 = vmatpush1.msra.mxu0 %v275
        %277 = vmatprep.subr.mxu0 0.0
        %v278 = vand.u32 %v195, 4294901760
        %279 = vmatpush1.msra.mxu0 %v278
        %280 = vmatprep.subr.mxu0 0.0
        %v281 = vand.u32 %v196, 4294901760
        %282 = vmatpush1.msra.mxu0 %v281
        %283 = vmatprep.subr.mxu0 0.0
        %v284 = vand.u32 %v197, 4294901760
        %285 = vmatpush1.msra.mxu0 %v284
        %286 = vmatprep.subr.mxu0 0.0
        %v287 = vand.u32 %v198, 4294901760
        %288 = vmatpush1.msra.mxu0 %v287
        %289 = vmatprep.subr.mxu0 0.0
        %v290 = vand.u32 %v199, 4294901760
        %291 = vmatpush1.msra.mxu0 %v290
        %292 = vmatprep.subr.mxu0 0.0
        %v293 = vand.u32 %v200, 4294901760
        %294 = vmatpush1.msra.mxu0 %v293
        %295 = vmatprep.subr.mxu0 0.0
        %v296 = vand.u32 %v201, 4294901760
        %297 = vmatpush1.msra.mxu0 %v296
        %298 = vmatprep.subr.mxu0 0.0
        %v299 = vand.u32 %v202, 4294901760
        %300 = vmatpush1.msra.mxu0 %v299
        %301 = vmatprep.subr.mxu0 0.0
        %v302 = vand.u32 %v203, 4294901760
        %303 = vmatpush1.msra.mxu0 %v302
        %v304 = vand.u32 %v206, 4294901760
        %v305 = vsub.f32 %v206, %v304
        %v306 = vand.u32 %v305, 4294901760
        %v307 = vsub.f32 %v305, %v306
        %v308 = vand.u32 %v307, 4294901760
        %309 = vmatprep.mubr.f32.mxu0 %v308
        %v310 = vand.u32 %v204, 4294901760
        %v311 = vsub.f32 %v204, %v310
        %v312 = vand.u32 %v311, 4294901760
        %v313 = vsub.f32 %v311, %v312
        %v314 = vand.u32 %v313, 4294901760
        %315 = vmatmul.mubr.f32.gmra.mrb[0].mxu0 %v314
        %v316 = vpop.f32.mrb[0].mxu0
        %v317 = vadd.f32 0.0, %v316
        %v318 = vpop.f32.mrb[0].mxu0
        %319 = vdwg.mxu0
        %320 = vmatprep.subr.mxu0 0.0
        %v321 = vand.u32 %v172, 4294901760
        %v322 = vsub.f32 %v172, %v321
        %v323 = vand.u32 %v322, 4294901760
        %v324 = vsub.f32 %v322, %v323
        %v325 = vand.u32 %v324, 4294901760
        %326 = vmatpush1.msra.mxu0 %v325
        %327 = vmatprep.subr.mxu0 0.0
        %v328 = vand.u32 %v173, 4294901760
        %v329 = vsub.f32 %v173, %v328
        %v330 = vand.u32 %v329, 4294901760
        %v331 = vsub.f32 %v329, %v330
        %v332 = vand.u32 %v331, 4294901760
        %333 = vmatpush1.msra.mxu0 %v332
        %334 = vmatprep.subr.mxu0 0.0
        %v335 = vand.u32 %v174, 4294901760
        %v336 = vsub.f32 %v174, %v335
        %v337 = vand.u32 %v336, 4294901760
        %v338 = vsub.f32 %v336, %v337
        %v339 = vand.u32 %v338, 4294901760
        %340 = vmatpush1.msra.mxu0 %v339
        %341 = vmatprep.subr.mxu0 0.0
        %v342 = vand.u32 %v175, 4294901760
        %v343 = vsub.f32 %v175, %v342
        %v344 = vand.u32 %v343, 4294901760
        %v345 = vsub.f32 %v343, %v344
        %v346 = vand.u32 %v345, 4294901760
        %347 = vmatpush1.msra.mxu0 %v346
        %348 = vmatprep.subr.mxu0 0.0
        %v349 = vand.u32 %v176, 4294901760
        %v350 = vsub.f32 %v176, %v349
        %v351 = vand.u32 %v350, 4294901760
        %v352 = vsub.f32 %v350, %v351
        %v353 = vand.u32 %v352, 4294901760
        %354 = vmatpush1.msra.mxu0 %v353
        %355 = vmatprep.subr.mxu0 0.0
        %v356 = vand.u32 %v177, 4294901760
        %v357 = vsub.f32 %v177, %v356
        %v358 = vand.u32 %v357, 4294901760
        %v359 = vsub.f32 %v357, %v358
        %v360 = vand.u32 %v359, 4294901760
        %361 = vmatpush1.msra.mxu0 %v360
        %362 = vmatprep.subr.mxu0 0.0
        %v363 = vand.u32 %v178, 4294901760
        %v364 = vsub.f32 %v178, %v363
        %v365 = vand.u32 %v364, 4294901760
        %v366 = vsub.f32 %v364, %v365
        %v367 = vand.u32 %v366, 4294901760
        %368 = vmatpush1.msra.mxu0 %v367
        %369 = vmatprep.subr.mxu0 0.0
        %v370 = vand.u32 %v179, 4294901760
        %v371 = vsub.f32 %v179, %v370
        %v372 = vand.u32 %v371, 4294901760
        %v373 = vsub.f32 %v371, %v372
        %v374 = vand.u32 %v373, 4294901760
        %375 = vmatpush1.msra.mxu0 %v374
        %376 = vmatprep.subr.mxu0 0.0
        %v377 = vand.u32 %v180, 4294901760
        %v378 = vsub.f32 %v180, %v377
        %v379 = vand.u32 %v378, 4294901760
        %v380 = vsub.f32 %v378, %v379
        %v381 = vand.u32 %v380, 4294901760
        %382 = vmatpush1.msra.mxu0 %v381
        %383 = vmatprep.subr.mxu0 0.0
        %v384 = vand.u32 %v181, 4294901760
        %v385 = vsub.f32 %v181, %v384
        %v386 = vand.u32 %v385, 4294901760
        %v387 = vsub.f32 %v385, %v386
        %v388 = vand.u32 %v387, 4294901760
        %389 = vmatpush1.msra.mxu0 %v388
        %390 = vmatprep.subr.mxu0 0.0
        %v391 = vand.u32 %v182, 4294901760
        %v392 = vsub.f32 %v182, %v391
        %v393 = vand.u32 %v392, 4294901760
        %v394 = vsub.f32 %v392, %v393
        %v395 = vand.u32 %v394, 4294901760
        %396 = vmatpush1.msra.mxu0 %v395
        %397 = vmatprep.subr.mxu0 0.0
        %v398 = vand.u32 %v183, 4294901760
        %v399 = vsub.f32 %v183, %v398
        %v400 = vand.u32 %v399, 4294901760
        %v401 = vsub.f32 %v399, %v400
        %v402 = vand.u32 %v401, 4294901760
        %403 = vmatpush1.msra.mxu0 %v402
        %404 = vmatprep.subr.mxu0 0.0
        %v405 = vand.u32 %v184, 4294901760
        %v406 = vsub.f32 %v184, %v405
        %v407 = vand.u32 %v406, 4294901760
        %v408 = vsub.f32 %v406, %v407
        %v409 = vand.u32 %v408, 4294901760
        %410 = vmatpush1.msra.mxu0 %v409
        %411 = vmatprep.subr.mxu0 0.0
        %v412 = vand.u32 %v185, 4294901760
        %v413 = vsub.f32 %v185, %v412
        %v414 = vand.u32 %v413, 4294901760
        %v415 = vsub.f32 %v413, %v414
        %v416 = vand.u32 %v415, 4294901760
        %417 = vmatpush1.msra.mxu0 %v416
        %418 = vmatprep.subr.mxu0 0.0
        %v419 = vand.u32 %v186, 4294901760
        %v420 = vsub.f32 %v186, %v419
        %v421 = vand.u32 %v420, 4294901760
        %v422 = vsub.f32 %v420, %v421
        %v423 = vand.u32 %v422, 4294901760
        %424 = vmatpush1.msra.mxu0 %v423
        %425 = vmatprep.subr.mxu0 0.0
        %v426 = vand.u32 %v187, 4294901760
        %v427 = vsub.f32 %v187, %v426
        %v428 = vand.u32 %v427, 4294901760
        %v429 = vsub.f32 %v427, %v428
        %v430 = vand.u32 %v429, 4294901760
        %431 = vmatpush1.msra.mxu0 %v430
        %432 = vmatprep.subr.mxu0 0.0
        %v433 = vand.u32 %v188, 4294901760
        %v434 = vsub.f32 %v188, %v433
        %v435 = vand.u32 %v434, 4294901760
        %v436 = vsub.f32 %v434, %v435
        %v437 = vand.u32 %v436, 4294901760
        %438 = vmatpush1.msra.mxu0 %v437
        %439 = vmatprep.subr.mxu0 0.0
        %v440 = vand.u32 %v189, 4294901760
        %v441 = vsub.f32 %v189, %v440
        %v442 = vand.u32 %v441, 4294901760
        %v443 = vsub.f32 %v441, %v442
        %v444 = vand.u32 %v443, 4294901760
        %445 = vmatpush1.msra.mxu0 %v444
        %446 = vmatprep.subr.mxu0 0.0
        %v447 = vand.u32 %v190, 4294901760
        %v448 = vsub.f32 %v190, %v447
        %v449 = vand.u32 %v448, 4294901760
        %v450 = vsub.f32 %v448, %v449
        %v451 = vand.u32 %v450, 4294901760
        %452 = vmatpush1.msra.mxu0 %v451
        %453 = vmatprep.subr.mxu0 0.0
        %v454 = vand.u32 %v191, 4294901760
        %v455 = vsub.f32 %v191, %v454
        %v456 = vand.u32 %v455, 4294901760
        %v457 = vsub.f32 %v455, %v456
        %v458 = vand.u32 %v457, 4294901760
        %459 = vmatpush1.msra.mxu0 %v458
        %460 = vmatprep.subr.mxu0 0.0
        %v461 = vand.u32 %v192, 4294901760
        %v462 = vsub.f32 %v192, %v461
        %v463 = vand.u32 %v462, 4294901760
        %v464 = vsub.f32 %v462, %v463
        %v465 = vand.u32 %v464, 4294901760
        %466 = vmatpush1.msra.mxu0 %v465
        %467 = vmatprep.subr.mxu0 0.0
        %v468 = vand.u32 %v193, 4294901760
        %v469 = vsub.f32 %v193, %v468
        %v470 = vand.u32 %v469, 4294901760
        %v471 = vsub.f32 %v469, %v470
        %v472 = vand.u32 %v471, 4294901760
        %473 = vmatpush1.msra.mxu0 %v472
        %474 = vmatprep.subr.mxu0 0.0
        %v475 = vand.u32 %v194, 4294901760
        %v476 = vsub.f32 %v194, %v475
        %v477 = vand.u32 %v476, 4294901760
        %v478 = vsub.f32 %v476, %v477
        %v479 = vand.u32 %v478, 4294901760
        %480 = vmatpush1.msra.mxu0 %v479
        %481 = vmatprep.subr.mxu0 0.0
        %v482 = vand.u32 %v195, 4294901760
        %v483 = vsub.f32 %v195, %v482
        %v484 = vand.u32 %v483, 4294901760
        %v485 = vsub.f32 %v483, %v484
        %v486 = vand.u32 %v485, 4294901760
        %487 = vmatpush1.msra.mxu0 %v486
        %488 = vmatprep.subr.mxu0 0.0
        %v489 = vand.u32 %v196, 4294901760
        %v490 = vsub.f32 %v196, %v489
        %v491 = vand.u32 %v490, 4294901760
        %v492 = vsub.f32 %v490, %v491
        %v493 = vand.u32 %v492, 4294901760
        %494 = vmatpush1.msra.mxu0 %v493
        %495 = vmatprep.subr.mxu0 0.0
        %v496 = vand.u32 %v197, 4294901760
        %v497 = vsub.f32 %v197, %v496
        %v498 = vand.u32 %v497, 4294901760
        %v499 = vsub.f32 %v497, %v498
        %v500 = vand.u32 %v499, 4294901760
        %501 = vmatpush1.msra.mxu0 %v500
        %502 = vmatprep.subr.mxu0 0.0
        %v503 = vand.u32 %v198, 4294901760
        %v504 = vsub.f32 %v198, %v503
        %v505 = vand.u32 %v504, 4294901760
        %v506 = vsub.f32 %v504, %v505
        %v507 = vand.u32 %v506, 4294901760
        %508 = vmatpush1.msra.mxu0 %v507
        %509 = vmatprep.subr.mxu0 0.0
        %v510 = vand.u32 %v199, 4294901760
        %v511 = vsub.f32 %v199, %v510
        %v512 = vand.u32 %v511, 4294901760
        %v513 = vsub.f32 %v511, %v512
        %v514 = vand.u32 %v513, 4294901760
        %515 = vmatpush1.msra.mxu0 %v514
        %516 = vmatprep.subr.mxu0 0.0
        %v517 = vand.u32 %v200, 4294901760
        %v518 = vsub.f32 %v200, %v517
        %v519 = vand.u32 %v518, 4294901760
        %v520 = vsub.f32 %v518, %v519
        %v521 = vand.u32 %v520, 4294901760
        %522 = vmatpush1.msra.mxu0 %v521
        %523 = vmatprep.subr.mxu0 0.0
        %v524 = vand.u32 %v201, 4294901760
        %v525 = vsub.f32 %v201, %v524
        %v526 = vand.u32 %v525, 4294901760
        %v527 = vsub.f32 %v525, %v526
        %v528 = vand.u32 %v527, 4294901760
        %529 = vmatpush1.msra.mxu0 %v528
        %530 = vmatprep.subr.mxu0 0.0
        %v531 = vand.u32 %v202, 4294901760
        %v532 = vsub.f32 %v202, %v531
        %v533 = vand.u32 %v532, 4294901760
        %v534 = vsub.f32 %v532, %v533
        %v535 = vand.u32 %v534, 4294901760
        %536 = vmatpush1.msra.mxu0 %v535
        %537 = vmatprep.subr.mxu0 0.0
        %v538 = vand.u32 %v203, 4294901760
        %v539 = vsub.f32 %v203, %v538
        %v540 = vand.u32 %v539, 4294901760
        %v541 = vsub.f32 %v539, %v540
        %v542 = vand.u32 %v541, 4294901760
        %543 = vmatpush1.msra.mxu0 %v542
        %v544 = vand.u32 %v206, 4294901760
        %545 = vmatprep.mubr.f32.mxu0 %v544
        %v546 = vand.u32 %v204, 4294901760
        %547 = vmatmul.mubr.f32.gmra.mrb[0].mxu0 %v546
        %v548 = vpop.f32.mrb[0].mxu0
        %v549 = vadd.f32 %v317, %v548
        %v550 = vpop.f32.mrb[0].mxu0
        %551 = vdwg.mxu0
        %552 = vmatprep.subr.mxu0 0.0
        %v553 = vand.u32 %v172, 4294901760
        %v554 = vsub.f32 %v172, %v553
        %555 = vmatpush1.msra.mxu0 %v554
        %556 = vmatprep.subr.mxu0 0.0
        %v557 = vand.u32 %v173, 4294901760
        %v558 = vsub.f32 %v173, %v557
        %559 = vmatpush1.msra.mxu0 %v558
        %560 = vmatprep.subr.mxu0 0.0
        %v561 = vand.u32 %v174, 4294901760
        %v562 = vsub.f32 %v174, %v561
        %563 = vmatpush1.msra.mxu0 %v562
        %564 = vmatprep.subr.mxu0 0.0
        %v565 = vand.u32 %v175, 4294901760
        %v566 = vsub.f32 %v175, %v565
        %567 = vmatpush1.msra.mxu0 %v566
        %568 = vmatprep.subr.mxu0 0.0
        %v569 = vand.u32 %v176, 4294901760
        %v570 = vsub.f32 %v176, %v569
        %571 = vmatpush1.msra.mxu0 %v570
        %572 = vmatprep.subr.mxu0 0.0
        %v573 = vand.u32 %v177, 4294901760
        %v574 = vsub.f32 %v177, %v573
        %575 = vmatpush1.msra.mxu0 %v574
        %576 = vmatprep.subr.mxu0 0.0
        %v577 = vand.u32 %v178, 4294901760
        %v578 = vsub.f32 %v178, %v577
        %579 = vmatpush1.msra.mxu0 %v578
        %580 = vmatprep.subr.mxu0 0.0
        %v581 = vand.u32 %v179, 4294901760
        %v582 = vsub.f32 %v179, %v581
        %583 = vmatpush1.msra.mxu0 %v582
        %584 = vmatprep.subr.mxu0 0.0
        %v585 = vand.u32 %v180, 4294901760
        %v586 = vsub.f32 %v180, %v585
        %587 = vmatpush1.msra.mxu0 %v586
        %588 = vmatprep.subr.mxu0 0.0
        %v589 = vand.u32 %v181, 4294901760
        %v590 = vsub.f32 %v181, %v589
        %591 = vmatpush1.msra.mxu0 %v590
        %592 = vmatprep.subr.mxu0 0.0
        %v593 = vand.u32 %v182, 4294901760
        %v594 = vsub.f32 %v182, %v593
        %595 = vmatpush1.msra.mxu0 %v594
        %596 = vmatprep.subr.mxu0 0.0
        %v597 = vand.u32 %v183, 4294901760
        %v598 = vsub.f32 %v183, %v597
        %599 = vmatpush1.msra.mxu0 %v598
        %600 = vmatprep.subr.mxu0 0.0
        %v601 = vand.u32 %v184, 4294901760
        %v602 = vsub.f32 %v184, %v601
        %603 = vmatpush1.msra.mxu0 %v602
        %604 = vmatprep.subr.mxu0 0.0
        %v605 = vand.u32 %v185, 4294901760
        %v606 = vsub.f32 %v185, %v605
        %607 = vmatpush1.msra.mxu0 %v606
        %608 = vmatprep.subr.mxu0 0.0
        %v609 = vand.u32 %v186, 4294901760
        %v610 = vsub.f32 %v186, %v609
        %611 = vmatpush1.msra.mxu0 %v610
        %612 = vmatprep.subr.mxu0 0.0
        %v613 = vand.u32 %v187, 4294901760
        %v614 = vsub.f32 %v187, %v613
        %615 = vmatpush1.msra.mxu0 %v614
        %616 = vmatprep.subr.mxu0 0.0
        %v617 = vand.u32 %v188, 4294901760
        %v618 = vsub.f32 %v188, %v617
        %619 = vmatpush1.msra.mxu0 %v618
        %620 = vmatprep.subr.mxu0 0.0
        %v621 = vand.u32 %v189, 4294901760
        %v622 = vsub.f32 %v189, %v621
        %623 = vmatpush1.msra.mxu0 %v622
        %624 = vmatprep.subr.mxu0 0.0
        %v625 = vand.u32 %v190, 4294901760
        %v626 = vsub.f32 %v190, %v625
        %627 = vmatpush1.msra.mxu0 %v626
        %628 = vmatprep.subr.mxu0 0.0
        %v629 = vand.u32 %v191, 4294901760
        %v630 = vsub.f32 %v191, %v629
        %631 = vmatpush1.msra.mxu0 %v630
        %632 = vmatprep.subr.mxu0 0.0
        %v633 = vand.u32 %v192, 4294901760
        %v634 = vsub.f32 %v192, %v633
        %635 = vmatpush1.msra.mxu0 %v634
        %636 = vmatprep.subr.mxu0 0.0
        %v637 = vand.u32 %v193, 4294901760
        %v638 = vsub.f32 %v193, %v637
        %639 = vmatpush1.msra.mxu0 %v638
        %640 = vmatprep.subr.mxu0 0.0
        %v641 = vand.u32 %v194, 4294901760
        %v642 = vsub.f32 %v194, %v641
        %643 = vmatpush1.msra.mxu0 %v642
        %644 = vmatprep.subr.mxu0 0.0
        %v645 = vand.u32 %v195, 4294901760
        %v646 = vsub.f32 %v195, %v645
        %647 = vmatpush1.msra.mxu0 %v646
        %648 = vmatprep.subr.mxu0 0.0
        %v649 = vand.u32 %v196, 4294901760
        %v650 = vsub.f32 %v196, %v649
        %651 = vmatpush1.msra.mxu0 %v650
        %652 = vmatprep.subr.mxu0 0.0
        %v653 = vand.u32 %v197, 4294901760
        %v654 = vsub.f32 %v197, %v653
        %655 = vmatpush1.msra.mxu0 %v654
        %656 = vmatprep.subr.mxu0 0.0
        %v657 = vand.u32 %v198, 4294901760
        %v658 = vsub.f32 %v198, %v657
        %659 = vmatpush1.msra.mxu0 %v658
        %660 = vmatprep.subr.mxu0 0.0
        %v661 = vand.u32 %v199, 4294901760
        %v662 = vsub.f32 %v199, %v661
        %663 = vmatpush1.msra.mxu0 %v662
        %664 = vmatprep.subr.mxu0 0.0
        %v665 = vand.u32 %v200, 4294901760
        %v666 = vsub.f32 %v200, %v665
        %667 = vmatpush1.msra.mxu0 %v666
        %668 = vmatprep.subr.mxu0 0.0
        %v669 = vand.u32 %v201, 4294901760
        %v670 = vsub.f32 %v201, %v669
        %671 = vmatpush1.msra.mxu0 %v670
        %672 = vmatprep.subr.mxu0 0.0
        %v673 = vand.u32 %v202, 4294901760
        %v674 = vsub.f32 %v202, %v673
        %675 = vmatpush1.msra.mxu0 %v674
        %676 = vmatprep.subr.mxu0 0.0
        %v677 = vand.u32 %v203, 4294901760
        %v678 = vsub.f32 %v203, %v677
        %679 = vmatpush1.msra.mxu0 %v678
        %v680 = vand.u32 %v206, 4294901760
        %v681 = vsub.f32 %v206, %v680
        %682 = vmatprep.mubr.f32.mxu0 %v681
        %v683 = vand.u32 %v204, 4294901760
        %v684 = vsub.f32 %v204, %v683
        %685 = vmatmul.mubr.f32.gmra.mrb[0].mxu0 %v684
        %v686 = vpop.f32.mrb[0].mxu0
        %v687 = vadd.f32 %v549, %v686
        %v688 = vpop.f32.mrb[0].mxu0
        %689 = vdwg.mxu0
        %690 = vmatprep.subr.mxu0 0.0
        %v691 = vand.u32 %v172, 4294901760
        %692 = vmatpush1.msra.mxu0 %v691
        %693 = vmatprep.subr.mxu0 0.0
        %v694 = vand.u32 %v173, 4294901760
        %695 = vmatpush1.msra.mxu0 %v694
        %696 = vmatprep.subr.mxu0 0.0
        %v697 = vand.u32 %v174, 4294901760
        %698 = vmatpush1.msra.mxu0 %v697
        %699 = vmatprep.subr.mxu0 0.0
        %v700 = vand.u32 %v175, 4294901760
        %701 = vmatpush1.msra.mxu0 %v700
        %702 = vmatprep.subr.mxu0 0.0
        %v703 = vand.u32 %v176, 4294901760
        %704 = vmatpush1.msra.mxu0 %v703
        %705 = vmatprep.subr.mxu0 0.0
        %v706 = vand.u32 %v177, 4294901760
        %707 = vmatpush1.msra.mxu0 %v706
        %708 = vmatprep.subr.mxu0 0.0
        %v709 = vand.u32 %v178, 4294901760
        %710 = vmatpush1.msra.mxu0 %v709
        %711 = vmatprep.subr.mxu0 0.0
        %v712 = vand.u32 %v179, 4294901760
        %713 = vmatpush1.msra.mxu0 %v712
        %714 = vmatprep.subr.mxu0 0.0
        %v715 = vand.u32 %v180, 4294901760
        %716 = vmatpush1.msra.mxu0 %v715
        %717 = vmatprep.subr.mxu0 0.0
        %v718 = vand.u32 %v181, 4294901760
        %719 = vmatpush1.msra.mxu0 %v718
        %720 = vmatprep.subr.mxu0 0.0
        %v721 = vand.u32 %v182, 4294901760
        %722 = vmatpush1.msra.mxu0 %v721
        %723 = vmatprep.subr.mxu0 0.0
        %v724 = vand.u32 %v183, 4294901760
        %725 = vmatpush1.msra.mxu0 %v724
        %726 = vmatprep.subr.mxu0 0.0
        %v727 = vand.u32 %v184, 4294901760
        %728 = vmatpush1.msra.mxu0 %v727
        %729 = vmatprep.subr.mxu0 0.0
        %v730 = vand.u32 %v185, 4294901760
        %731 = vmatpush1.msra.mxu0 %v730
        %732 = vmatprep.subr.mxu0 0.0
        %v733 = vand.u32 %v186, 4294901760
        %734 = vmatpush1.msra.mxu0 %v733
        %735 = vmatprep.subr.mxu0 0.0
        %v736 = vand.u32 %v187, 4294901760
        %737 = vmatpush1.msra.mxu0 %v736
        %738 = vmatprep.subr.mxu0 0.0
        %v739 = vand.u32 %v188, 4294901760
        %740 = vmatpush1.msra.mxu0 %v739
        %741 = vmatprep.subr.mxu0 0.0
        %v742 = vand.u32 %v189, 4294901760
        %743 = vmatpush1.msra.mxu0 %v742
        %744 = vmatprep.subr.mxu0 0.0
        %v745 = vand.u32 %v190, 4294901760
        %746 = vmatpush1.msra.mxu0 %v745
        %747 = vmatprep.subr.mxu0 0.0
        %v748 = vand.u32 %v191, 4294901760
        %749 = vmatpush1.msra.mxu0 %v748
        %750 = vmatprep.subr.mxu0 0.0
        %v751 = vand.u32 %v192, 4294901760
        %752 = vmatpush1.msra.mxu0 %v751
        %753 = vmatprep.subr.mxu0 0.0
        %v754 = vand.u32 %v193, 4294901760
        %755 = vmatpush1.msra.mxu0 %v754
        %756 = vmatprep.subr.mxu0 0.0
        %v757 = vand.u32 %v194, 4294901760
        %758 = vmatpush1.msra.mxu0 %v757
        %759 = vmatprep.subr.mxu0 0.0
        %v760 = vand.u32 %v195, 4294901760
        %761 = vmatpush1.msra.mxu0 %v760
        %762 = vmatprep.subr.mxu0 0.0
        %v763 = vand.u32 %v196, 4294901760
        %764 = vmatpush1.msra.mxu0 %v763
        %765 = vmatprep.subr.mxu0 0.0
        %v766 = vand.u32 %v197, 4294901760
        %767 = vmatpush1.msra.mxu0 %v766
        %768 = vmatprep.subr.mxu0 0.0
        %v769 = vand.u32 %v198, 4294901760
        %770 = vmatpush1.msra.mxu0 %v769
        %771 = vmatprep.subr.mxu0 0.0
        %v772 = vand.u32 %v199, 4294901760
        %773 = vmatpush1.msra.mxu0 %v772
        %774 = vmatprep.subr.mxu0 0.0
        %v775 = vand.u32 %v200, 4294901760
        %776 = vmatpush1.msra.mxu0 %v775
        %777 = vmatprep.subr.mxu0 0.0
        %v778 = vand.u32 %v201, 4294901760
        %779 = vmatpush1.msra.mxu0 %v778
        %780 = vmatprep.subr.mxu0 0.0
        %v781 = vand.u32 %v202, 4294901760
        %782 = vmatpush1.msra.mxu0 %v781
        %783 = vmatprep.subr.mxu0 0.0
        %v784 = vand.u32 %v203, 4294901760
        %785 = vmatpush1.msra.mxu0 %v784
        %v786 = vand.u32 %v206, 4294901760
        %v787 = vsub.f32 %v206, %v786
        %v788 = vand.u32 %v787, 4294901760
        %789 = vmatprep.mubr.f32.mxu0 %v788
        %v790 = vand.u32 %v204, 4294901760
        %v791 = vsub.f32 %v204, %v790
        %v792 = vand.u32 %v791, 4294901760
        %793 = vmatmul.mubr.f32.gmra.mrb[0].mxu0 %v792
        %v794 = vpop.f32.mrb[0].mxu0
        %v795 = vadd.f32 %v687, %v794
        %v796 = vpop.f32.mrb[0].mxu0
        %797 = vdwg.mxu0
        %798 = vmatprep.subr.mxu0 0.0
        %v799 = vand.u32 %v172, 4294901760
        %v800 = vsub.f32 %v172, %v799
        %v801 = vand.u32 %v800, 4294901760
        %802 = vmatpush1.msra.mxu0 %v801
        %803 = vmatprep.subr.mxu0 0.0
        %v804 = vand.u32 %v173, 4294901760
        %v805 = vsub.f32 %v173, %v804
        %v806 = vand.u32 %v805, 4294901760
        %807 = vmatpush1.msra.mxu0 %v806
        %808 = vmatprep.subr.mxu0 0.0
        %v809 = vand.u32 %v174, 4294901760
        %v810 = vsub.f32 %v174, %v809
        %v811 = vand.u32 %v810, 4294901760
        %812 = vmatpush1.msra.mxu0 %v811
        %813 = vmatprep.subr.mxu0 0.0
        %v814 = vand.u32 %v175, 4294901760
        %v815 = vsub.f32 %v175, %v814
        %v816 = vand.u32 %v815, 4294901760
        %817 = vmatpush1.msra.mxu0 %v816
        %818 = vmatprep.subr.mxu0 0.0
        %v819 = vand.u32 %v176, 4294901760
        %v820 = vsub.f32 %v176, %v819
        %v821 = vand.u32 %v820, 4294901760
        %822 = vmatpush1.msra.mxu0 %v821
        %823 = vmatprep.subr.mxu0 0.0
        %v824 = vand.u32 %v177, 4294901760
        %v825 = vsub.f32 %v177, %v824
        %v826 = vand.u32 %v825, 4294901760
        %827 = vmatpush1.msra.mxu0 %v826
        %828 = vmatprep.subr.mxu0 0.0
        %v829 = vand.u32 %v178, 4294901760
        %v830 = vsub.f32 %v178, %v829
        %v831 = vand.u32 %v830, 4294901760
        %832 = vmatpush1.msra.mxu0 %v831
        %833 = vmatprep.subr.mxu0 0.0
        %v834 = vand.u32 %v179, 4294901760
        %v835 = vsub.f32 %v179, %v834
        %v836 = vand.u32 %v835, 4294901760
        %837 = vmatpush1.msra.mxu0 %v836
        %838 = vmatprep.subr.mxu0 0.0
        %v839 = vand.u32 %v180, 4294901760
        %v840 = vsub.f32 %v180, %v839
        %v841 = vand.u32 %v840, 4294901760
        %842 = vmatpush1.msra.mxu0 %v841
        %843 = vmatprep.subr.mxu0 0.0
        %v844 = vand.u32 %v181, 4294901760
        %v845 = vsub.f32 %v181, %v844
        %v846 = vand.u32 %v845, 4294901760
        %847 = vmatpush1.msra.mxu0 %v846
        %848 = vmatprep.subr.mxu0 0.0
        %v849 = vand.u32 %v182, 4294901760
        %v850 = vsub.f32 %v182, %v849
        %v851 = vand.u32 %v850, 4294901760
        %852 = vmatpush1.msra.mxu0 %v851
        %853 = vmatprep.subr.mxu0 0.0
        %v854 = vand.u32 %v183, 4294901760
        %v855 = vsub.f32 %v183, %v854
        %v856 = vand.u32 %v855, 4294901760
        %857 = vmatpush1.msra.mxu0 %v856
        %858 = vmatprep.subr.mxu0 0.0
        %v859 = vand.u32 %v184, 4294901760
        %v860 = vsub.f32 %v184, %v859
        %v861 = vand.u32 %v860, 4294901760
        %862 = vmatpush1.msra.mxu0 %v861
        %863 = vmatprep.subr.mxu0 0.0
        %v864 = vand.u32 %v185, 4294901760
        %v865 = vsub.f32 %v185, %v864
        %v866 = vand.u32 %v865, 4294901760
        %867 = vmatpush1.msra.mxu0 %v866
        %868 = vmatprep.subr.mxu0 0.0
        %v869 = vand.u32 %v186, 4294901760
        %v870 = vsub.f32 %v186, %v869
        %v871 = vand.u32 %v870, 4294901760
        %872 = vmatpush1.msra.mxu0 %v871
        %873 = vmatprep.subr.mxu0 0.0
        %v874 = vand.u32 %v187, 4294901760
        %v875 = vsub.f32 %v187, %v874
        %v876 = vand.u32 %v875, 4294901760
        %877 = vmatpush1.msra.mxu0 %v876
        %878 = vmatprep.subr.mxu0 0.0
        %v879 = vand.u32 %v188, 4294901760
        %v880 = vsub.f32 %v188, %v879
        %v881 = vand.u32 %v880, 4294901760
        %882 = vmatpush1.msra.mxu0 %v881
        %883 = vmatprep.subr.mxu0 0.0
        %v884 = vand.u32 %v189, 4294901760
        %v885 = vsub.f32 %v189, %v884
        %v886 = vand.u32 %v885, 4294901760
        %887 = vmatpush1.msra.mxu0 %v886
        %888 = vmatprep.subr.mxu0 0.0
        %v889 = vand.u32 %v190, 4294901760
        %v890 = vsub.f32 %v190, %v889
        %v891 = vand.u32 %v890, 4294901760
        %892 = vmatpush1.msra.mxu0 %v891
        %893 = vmatprep.subr.mxu0 0.0
        %v894 = vand.u32 %v191, 4294901760
        %v895 = vsub.f32 %v191, %v894
        %v896 = vand.u32 %v895, 4294901760
        %897 = vmatpush1.msra.mxu0 %v896
        %898 = vmatprep.subr.mxu0 0.0
        %v899 = vand.u32 %v192, 4294901760
        %v900 = vsub.f32 %v192, %v899
        %v901 = vand.u32 %v900, 4294901760
        %902 = vmatpush1.msra.mxu0 %v901
        %903 = vmatprep.subr.mxu0 0.0
        %v904 = vand.u32 %v193, 4294901760
        %v905 = vsub.f32 %v193, %v904
        %v906 = vand.u32 %v905, 4294901760
        %907 = vmatpush1.msra.mxu0 %v906
        %908 = vmatprep.subr.mxu0 0.0
        %v909 = vand.u32 %v194, 4294901760
        %v910 = vsub.f32 %v194, %v909
        %v911 = vand.u32 %v910, 4294901760
        %912 = vmatpush1.msra.mxu0 %v911
        %913 = vmatprep.subr.mxu0 0.0
        %v914 = vand.u32 %v195, 4294901760
        %v915 = vsub.f32 %v195, %v914
        %v916 = vand.u32 %v915, 4294901760
        %917 = vmatpush1.msra.mxu0 %v916
        %918 = vmatprep.subr.mxu0 0.0
        %v919 = vand.u32 %v196, 4294901760
        %v920 = vsub.f32 %v196, %v919
        %v921 = vand.u32 %v920, 4294901760
        %922 = vmatpush1.msra.mxu0 %v921
        %923 = vmatprep.subr.mxu0 0.0
        %v924 = vand.u32 %v197, 4294901760
        %v925 = vsub.f32 %v197, %v924
        %v926 = vand.u32 %v925, 4294901760
        %927 = vmatpush1.msra.mxu0 %v926
        %928 = vmatprep.subr.mxu0 0.0
        %v929 = vand.u32 %v198, 4294901760
        %v930 = vsub.f32 %v198, %v929
        %v931 = vand.u32 %v930, 4294901760
        %932 = vmatpush1.msra.mxu0 %v931
        %933 = vmatprep.subr.mxu0 0.0
        %v934 = vand.u32 %v199, 4294901760
        %v935 = vsub.f32 %v199, %v934
        %v936 = vand.u32 %v935, 4294901760
        %937 = vmatpush1.msra.mxu0 %v936
        %938 = vmatprep.subr.mxu0 0.0
        %v939 = vand.u32 %v200, 4294901760
        %v940 = vsub.f32 %v200, %v939
        %v941 = vand.u32 %v940, 4294901760
        %942 = vmatpush1.msra.mxu0 %v941
        %943 = vmatprep.subr.mxu0 0.0
        %v944 = vand.u32 %v201, 4294901760
        %v945 = vsub.f32 %v201, %v944
        %v946 = vand.u32 %v945, 4294901760
        %947 = vmatpush1.msra.mxu0 %v946
        %948 = vmatprep.subr.mxu0 0.0
        %v949 = vand.u32 %v202, 4294901760
        %v950 = vsub.f32 %v202, %v949
        %v951 = vand.u32 %v950, 4294901760
        %952 = vmatpush1.msra.mxu0 %v951
        %953 = vmatprep.subr.mxu0 0.0
        %v954 = vand.u32 %v203, 4294901760
        %v955 = vsub.f32 %v203, %v954
        %v956 = vand.u32 %v955, 4294901760
        %957 = vmatpush1.msra.mxu0 %v956
        %v958 = vand.u32 %v206, 4294901760
        %959 = vmatprep.mubr.f32.mxu0 %v958
        %v960 = vand.u32 %v204, 4294901760
        %961 = vmatmul.mubr.f32.gmra.mrb[0].mxu0 %v960
        %v962 = vpop.f32.mrb[0].mxu0
        %v963 = vadd.f32 %v795, %v962
        %v964 = vpop.f32.mrb[0].mxu0
        %965 = vdwg.mxu0
        %966 = vmatprep.subr.mxu0 0.0
        %v967 = vand.u32 %v172, 4294901760
        %968 = vmatpush1.msra.mxu0 %v967
        %969 = vmatprep.subr.mxu0 0.0
        %v970 = vand.u32 %v173, 4294901760
        %971 = vmatpush1.msra.mxu0 %v970
        %972 = vmatprep.subr.mxu0 0.0
        %v973 = vand.u32 %v174, 4294901760
        %974 = vmatpush1.msra.mxu0 %v973
        %975 = vmatprep.subr.mxu0 0.0
        %v976 = vand.u32 %v175, 4294901760
        %977 = vmatpush1.msra.mxu0 %v976
        %978 = vmatprep.subr.mxu0 0.0
        %v979 = vand.u32 %v176, 4294901760
        %980 = vmatpush1.msra.mxu0 %v979
        %981 = vmatprep.subr.mxu0 0.0
        %v982 = vand.u32 %v177, 4294901760
        %983 = vmatpush1.msra.mxu0 %v982
        %984 = vmatprep.subr.mxu0 0.0
        %v985 = vand.u32 %v178, 4294901760
        %986 = vmatpush1.msra.mxu0 %v985
        %987 = vmatprep.subr.mxu0 0.0
        %v988 = vand.u32 %v179, 4294901760
        %989 = vmatpush1.msra.mxu0 %v988
        %990 = vmatprep.subr.mxu0 0.0
        %v991 = vand.u32 %v180, 4294901760
        %992 = vmatpush1.msra.mxu0 %v991
        %993 = vmatprep.subr.mxu0 0.0
        %v994 = vand.u32 %v181, 4294901760
        %995 = vmatpush1.msra.mxu0 %v994
        %996 = vmatprep.subr.mxu0 0.0
        %v997 = vand.u32 %v182, 4294901760
        %998 = vmatpush1.msra.mxu0 %v997
        %999 = vmatprep.subr.mxu0 0.0
        %v1000 = vand.u32 %v183, 4294901760
        %1001 = vmatpush1.msra.mxu0 %v1000
        %1002 = vmatprep.subr.mxu0 0.0
        %v1003 = vand.u32 %v184, 4294901760
        %1004 = vmatpush1.msra.mxu0 %v1003
        %1005 = vmatprep.subr.mxu0 0.0
        %v1006 = vand.u32 %v185, 4294901760
        %1007 = vmatpush1.msra.mxu0 %v1006
        %1008 = vmatprep.subr.mxu0 0.0
        %v1009 = vand.u32 %v186, 4294901760
        %1010 = vmatpush1.msra.mxu0 %v1009
        %1011 = vmatprep.subr.mxu0 0.0
        %v1012 = vand.u32 %v187, 4294901760
        %1013 = vmatpush1.msra.mxu0 %v1012
        %1014 = vmatprep.subr.mxu0 0.0
        %v1015 = vand.u32 %v188, 4294901760
        %1016 = vmatpush1.msra.mxu0 %v1015
        %1017 = vmatprep.subr.mxu0 0.0
        %v1018 = vand.u32 %v189, 4294901760
        %1019 = vmatpush1.msra.mxu0 %v1018
        %1020 = vmatprep.subr.mxu0 0.0
        %v1021 = vand.u32 %v190, 4294901760
        %1022 = vmatpush1.msra.mxu0 %v1021
        %1023 = vmatprep.subr.mxu0 0.0
        %v1024 = vand.u32 %v191, 4294901760
        %1025 = vmatpush1.msra.mxu0 %v1024
        %1026 = vmatprep.subr.mxu0 0.0
        %v1027 = vand.u32 %v192, 4294901760
        %1028 = vmatpush1.msra.mxu0 %v1027
        %1029 = vmatprep.subr.mxu0 0.0
        %v1030 = vand.u32 %v193, 4294901760
        %1031 = vmatpush1.msra.mxu0 %v1030
        %1032 = vmatprep.subr.mxu0 0.0
        %v1033 = vand.u32 %v194, 4294901760
        %1034 = vmatpush1.msra.mxu0 %v1033
        %1035 = vmatprep.subr.mxu0 0.0
        %v1036 = vand.u32 %v195, 4294901760
        %1037 = vmatpush1.msra.mxu0 %v1036
        %1038 = vmatprep.subr.mxu0 0.0
        %v1039 = vand.u32 %v196, 4294901760
        %1040 = vmatpush1.msra.mxu0 %v1039
        %1041 = vmatprep.subr.mxu0 0.0
        %v1042 = vand.u32 %v197, 4294901760
        %1043 = vmatpush1.msra.mxu0 %v1042
        %1044 = vmatprep.subr.mxu0 0.0
        %v1045 = vand.u32 %v198, 4294901760
        %1046 = vmatpush1.msra.mxu0 %v1045
        %1047 = vmatprep.subr.mxu0 0.0
        %v1048 = vand.u32 %v199, 4294901760
        %1049 = vmatpush1.msra.mxu0 %v1048
        %1050 = vmatprep.subr.mxu0 0.0
        %v1051 = vand.u32 %v200, 4294901760
        %1052 = vmatpush1.msra.mxu0 %v1051
        %1053 = vmatprep.subr.mxu0 0.0
        %v1054 = vand.u32 %v201, 4294901760
        %1055 = vmatpush1.msra.mxu0 %v1054
        %1056 = vmatprep.subr.mxu0 0.0
        %v1057 = vand.u32 %v202, 4294901760
        %1058 = vmatpush1.msra.mxu0 %v1057
        %1059 = vmatprep.subr.mxu0 0.0
        %v1060 = vand.u32 %v203, 4294901760
        %1061 = vmatpush1.msra.mxu0 %v1060
        %v1062 = vand.u32 %v206, 4294901760
        %1063 = vmatprep.mubr.f32.mxu0 %v1062
        %v1064 = vand.u32 %v204, 4294901760
        %1065 = vmatmul.mubr.f32.gmra.mrb[0].mxu0 %v1064
        %v1066 = vpop.f32.mrb[0].mxu0
        %v1067 = vadd.f32 %v963, %v1066
        %v1068 = vpop.f32.mrb[0].mxu0
        %1069 = vdwg.mxu0
        %v1070 = vmul.f32 %v1067, 0.25
        %vm1071 = vcmask 519168
        %1072 = vst.msk [vmem:[%s161] sm:$0xf] %vm1071, %v1070
        %1073 = vst.msk [vmem:[%s161 + $0x4] sm:$0xf] %vm1071, 0.0
        %s1074 = sand.u32 %s87, 1
        %s1075 = scalar_lea.sflag [#allocation3], %s1074
        %s1076 = sand.u32 %s87, 1
        %s1077 = smul.addr %s1076, 8
        %s1078 = scalar_lea.vmem [#allocation2], %s1077
        // Predicated region
        $region29: #{tpu_custom_call.1} parent=27 // pred_check
          %p1079 = pneg %p97
        $region30: #{tpu_custom_call.1} parent=27 // pred_check_branch
          %1081 = sbr.rel (%p1079) target = $region32
        $region31: #{tpu_custom_call.1} parent=27 // pred_region
          %s1083 = ssub.s32 128, 128
          %1084 = vsyncadd %s1075, %s1083
          %s1085 = sadd.s32 %s21, %s20
          %s1086 = smul.addr %s1085, 128
          %s1087 = scalar_lea.hbm %s2, %s1086
          %s1089 = sshll.u32 %s1078, 4
          %s1090 = int_to_ptr.vmem [resolvable:$true] %s1089
          %1092 = dma.vmem_to_hbm [thread:$0]  %s1090, 128, %s1087, %s1075
        $region32: #{tpu_custom_call.1} parent=27 // pred_fallthru
          _
      $region28: #{tpu_custom_call.1} parent=5 // pred_fallthru
        _
      %p1093 = scmp.le.s32.totalorder 2, %s11
      // Predicated region
      $region33: #{tpu_custom_call.1} parent=5 // pred_check
        %p1094 = pneg %p1093
      $region34: #{tpu_custom_call.1} parent=5 // pred_check_branch
        %1096 = sbr.rel (%p1094) target = $region36
      $region35: #{tpu_custom_call.1} parent=5 // pred_region
        %s1097 = ssub.s32 %s11, 2
        // Predicated region
        $region37: #{tpu_custom_call.1} parent=35 // pred_check
          %p1098 = pneg %p103
        $region38: #{tpu_custom_call.1} parent=35 // pred_check_branch
          %1100 = sbr.rel (%p1098) target = $region40
        $region39: #{tpu_custom_call.1} parent=35 // pred_region
          %s1101 = sand.u32 %s88, 1
          %s1102 = scalar_lea.sflag [#allocation3], %s1101
          %s1103 = sand.u32 %s88, 1
          %s1104 = smul.addr %s1103, 8
          %s1105 = scalar_lea.vmem [#allocation2], %s1104
          %1106 = dma.done %s1102, 128
        $region40: #{tpu_custom_call.1} parent=35 // pred_fallthru
          _
      $region36: #{tpu_custom_call.1} parent=5 // pred_fallthru
        _
    $region6: #{tpu_custom_call.1} parent=1 // loop_footer
      %s15 = sadd.s32 1, %s11
    $region7: #{tpu_custom_call.1} parent=1 // loop_footer_branch
      %10 = sbr.rel target = $region3
    $region8: #{tpu_custom_call.1} parent=1 // loop_exit
      _
    %1107 = vsyncpa [#allocation3], 1
    %s1108 = scalar_lea.sflag [#allocation3], 1
    %1109 = vsyncpa %s1108, 1

</llo_original>
